<compile_context>
chip_gen: v7x
topology: tpu7x:2x2x1
jax: 0.10.0
libtpu: 0.0.40
codegen_flags: <defaults>
</compile_context>

<pallas_src>
import jax
import jax.numpy as jnp
from jax.experimental import pallas as pl
from jax.experimental.pallas import tpu as pltpu


def _make_frozen_bn_kernel(fuse_relu: bool):
    def kernel(x_ref, scale_ref, shift_ref, o_ref):
        # x_ref / o_ref : (tr, ts)      scale_ref / shift_ref : (tr, 1)
        y = x_ref[...] * scale_ref[...] + shift_ref[...]
        if fuse_relu:
            y = jnp.maximum(y, 0)
        o_ref[...] = y.astype(o_ref.dtype)
    return kernel


def _round_up(x, m):
    return ((x + m - 1) // m) * m


def detr_frozen_batchnorm2d(x, weight, bias, running_mean, running_var,
                            eps=1e-5, fuse_relu=False):
    """x: [B, C, H, W] (NCHW); per-channel params: [C]. Returns [B, C, H, W]."""
    B, C, H, W = x.shape
    HW = H * W
    R = B * C

    # ---- Fold the frozen statistics into per-channel scale/shift (f32). ----
    f32 = jnp.float32
    scale_c = weight.astype(f32) * jax.lax.rsqrt(running_var.astype(f32) + eps)
    shift_c = bias.astype(f32) - running_mean.astype(f32) * scale_c

    # 16-bit activations -> do the FMA natively in that dtype (bf16 VPU on
    # v6e/v7x, halves vreg pressure); otherwise keep f32 parameters.
    itemsize = jnp.dtype(x.dtype).itemsize
    param_dtype = x.dtype if itemsize == 2 else f32

    # Fold batch into the row (sublane) axis: rows = B*C, params tiled per row.
    scale = jnp.tile(scale_c.astype(param_dtype), (B,)).reshape(R, 1)
    shift = jnp.tile(shift_c.astype(param_dtype), (B,)).reshape(R, 1)
    x2 = x.reshape(R, HW)

    # ---- Tile selection: byte-budgeted, ragged-safe. ----
    # Sublane packing unit per dtype: f32 -> 8, bf16/f16 -> 16, 8-bit -> 32.
    sub_unit = max(8, 32 // itemsize)
    # ~3 MiB of activation per block: 2x double-buffered (in + out) ~ 12 MiB,
    # which fits every generation's default scoped VMEM (v5e 16 MiB, v6e
    # 32 MiB, v7x 32/64 MiB) with headroom for the tiny param blocks.
    budget = 3 * 1024 * 1024
    ts = min(_round_up(HW, 128), 4096)                      # lane tile
    tr = max(sub_unit, (budget // (ts * itemsize)) // sub_unit * sub_unit)
    tr = min(tr, _round_up(R, sub_unit))                    # sublane tile

    grid = (pl.cdiv(R, tr), pl.cdiv(HW, ts))                # ragged last blocks OK

    total = R * HW
    cost = pl.CostEstimate(
        flops=2 * total,
        transcendentals=0,
        bytes_accessed=2 * total * itemsize
        + 2 * R * jnp.dtype(param_dtype).itemsize)

    out = pl.pallas_call(
        _make_frozen_bn_kernel(fuse_relu),
        out_shape=jax.ShapeDtypeStruct((R, HW), x.dtype),
        grid_spec=pltpu.PrefetchScalarGridSpec(
            num_scalar_prefetch=0,
            grid=grid,
            in_specs=[
                pl.BlockSpec((tr, ts), lambda r, s: (r, s)),  # x
                pl.BlockSpec((tr, 1), lambda r, s: (r, 0)),   # scale (resident across s)
                pl.BlockSpec((tr, 1), lambda r, s: (r, 0)),   # shift (resident across s)
            ],
            out_specs=pl.BlockSpec((tr, ts), lambda r, s: (r, s)),
        ),
        compiler_params=pltpu.CompilerParams(
            dimension_semantics=("parallel", "parallel")),
        cost_estimate=cost,
    )(x2, scale, shift)

    return out.reshape(B, C, H, W)


def _reference(x, weight, bias, running_mean, running_var, eps=1e-5):
    """Pure-JAX replica of the PyTorch forward."""
    w = weight.reshape(1, -1, 1, 1)
    b = bias.reshape(1, -1, 1, 1)
    rv = running_var.reshape(1, -1, 1, 1)
    rm = running_mean.reshape(1, -1, 1, 1)
    scale = w * jax.lax.rsqrt(rv + eps)
    b = b - rm * scale
    return x * scale + b


def _run_case(B, C, H, W, key):
    kx, kw, kb, km, kv = jax.random.split(key, 5)
    x = jax.random.normal(kx, (B, C, H, W), dtype=jnp.float32)
    weight = jax.random.normal(kw, (C,), dtype=jnp.float32) * 0.5 + 1.0
    bias = jax.random.normal(kb, (C,), dtype=jnp.float32) * 0.1
    running_mean = jax.random.normal(km, (C,), dtype=jnp.float32) * 0.2
    running_var = jax.random.uniform(kv, (C,), dtype=jnp.float32,
                                     minval=0.5, maxval=2.0)

    out = detr_frozen_batchnorm2d(x, weight, bias, running_mean, running_var)
    out = jax.block_until_ready(out)

    ref = _reference(x, weight, bias, running_mean, running_var)
    assert out.shape == (B, C, H, W)
    assert jnp.allclose(out, ref, atol=1e-5, rtol=1e-5), "mismatch vs reference"


if __name__ == "__main__":
    key = jax.random.PRNGKey(0)
    k0, k1 = jax.random.split(key)

    # Aligned small case consistent with the module (NCHW, per-channel buffers).
    _run_case(2, 4, 16, 16, k0)
    # Ragged case: C not a multiple of 8, H*W not a multiple of 128 — exercises
    # the cdiv grid + padded last block path used by real DETR feature maps.
    _run_case(2, 3, 10, 15, k1)

    print("KERNEL_OK")
</pallas_src>

<mosaic_0001>
module attributes {stable_mosaic.version = 11 : i64} {
  func.func @kernel(%arg0: i32, %arg1: i32, %arg2: memref<8x256xf32, #tpu.memory_space<vmem>>, %arg3: memref<8x1xf32, #tpu.memory_space<vmem>>, %arg4: memref<8x1xf32, #tpu.memory_space<vmem>>, %arg5: memref<8x256xf32, #tpu.memory_space<vmem>>) attributes {dimension_semantics = [#tpu.dimension_semantics<parallel>, #tpu.dimension_semantics<parallel>], iteration_bounds = array<i64: 1, 1>, scalar_prefetch = 0 : i64, scratch_operands = 0 : i64, tpu.core_type = #tpu.core_type<tc>, window_params = [{transform_indices = @transform_0, window_bounds = array<i64: 8, 256>}, {transform_indices = @transform_1, window_bounds = array<i64: 8, 1>}, {transform_indices = @transform_2, window_bounds = array<i64: 8, 1>}, {transform_indices = @transform_3, window_bounds = array<i64: 8, 256>}]} {
    %c0 = arith.constant 0 : index
    %c0_0 = arith.constant 0 : index
    %0 = vector.load %arg2[%c0, %c0_0] : memref<8x256xf32, #tpu.memory_space<vmem>>, vector<8x256xf32>
    %c0_1 = arith.constant 0 : index
    %c0_2 = arith.constant 0 : index
    %1 = vector.load %arg3[%c0_1, %c0_2] : memref<8x1xf32, #tpu.memory_space<vmem>>, vector<8x1xf32>
    %2 = vector.broadcast %1 : vector<8x1xf32> to vector<8x256xf32>
    %3 = arith.mulf %0, %2 : vector<8x256xf32>
    %c0_3 = arith.constant 0 : index
    %c0_4 = arith.constant 0 : index
    %4 = vector.load %arg4[%c0_3, %c0_4] : memref<8x1xf32, #tpu.memory_space<vmem>>, vector<8x1xf32>
    %5 = vector.broadcast %4 : vector<8x1xf32> to vector<8x256xf32>
    %6 = arith.addf %3, %5 : vector<8x256xf32>
    %c0_5 = arith.constant 0 : index
    %c0_6 = arith.constant 0 : index
    %7 = vector.load %arg5[%c0_5, %c0_6] : memref<8x256xf32, #tpu.memory_space<vmem>>, vector<8x256xf32>
    tpu.vector_store %arg5[%c0_5, %c0_6], %6 {strides = array<i32>} : memref<8x256xf32, #tpu.memory_space<vmem>>, vector<8x256xf32>,
    return
  }
  func.func @transform_0(%arg0: i32, %arg1: i32) -> (i32, i32) {
    %c0_i32 = arith.constant 0 : i32
    return %arg0, %arg1 : i32, i32
  }
  func.func @transform_1(%arg0: i32, %arg1: i32) -> (i32, i32) {
    %c0_i32 = arith.constant 0 : i32
    %c0_i32_0 = arith.constant 0 : i32
    return %arg0, %c0_i32 : i32, i32
  }
  func.func @transform_2(%arg0: i32, %arg1: i32) -> (i32, i32) {
    %c0_i32 = arith.constant 0 : i32
    %c0_i32_0 = arith.constant 0 : i32
    return %arg0, %c0_i32 : i32, i32
  }
  func.func @transform_3(%arg0: i32, %arg1: i32) -> (i32, i32) {
    %c0_i32 = arith.constant 0 : i32
    return %arg0, %arg1 : i32, i32
  }
}

</mosaic_0001>

<llo_original>
// kernel: tpu_custom_call.1
$region0: #{tpu_custom_call.1}
  #allocation0 [shape = 'u32[]', space=smem, size = 0x4, offset = 0x4, fixed_abs, tag = 'smem constant byte address 0x4 - core index']
  #allocation1 [shape = 'u32[144,128]{1,0:T(1,128)}', space=vmem, size = 0x12000, scoped, tag = 'internal scratch']
  %s0 = inlined_call_operand.vmem [shape: f32[8,256], index: 0, kind: input, shape index: {}]
  %s1 = inlined_call_operand.vmem [shape: f32[8,1], index: 1, kind: input, shape index: {}]
  %s2 = inlined_call_operand.vmem [shape: f32[8,1], index: 2, kind: input, shape index: {}]
  %s3 = inlined_call_operand.hbm [shape: f32[8,256], index: 3, kind: output, shape index: {}]
  %s4 = sld [smem:[#allocation0]]
  $region22: #{tpu_custom_call.1} parent=0
    _
  %s6 = ssub.s32 1, %s4
  %s7 = scalar_select 0, %s6, %s4
  $region1: #{tpu_custom_call.1} parent=0
    #allocation2 [shape = 'u8[8192]{0}', space=vmem, size = 0x2000, scoped, tag = 'output window, operand 0, single buffered']
    #allocation3 [shape = 's32[1]{0}', space=sflag, size = 0x4, scoped, tag = 'scoped memory for tpu_custom_call.1']
    %8 = vsyncpa [#allocation3], 0
    // Predicated region
    $region2: #{tpu_custom_call.1} parent=1 // pred_check
      _
    $region3: #{tpu_custom_call.1} parent=1 // pred_check_branch
      %10 = sbr.rel (0) target = $region5
    $region4: #{tpu_custom_call.1} parent=1 // pred_region
      _
    $region5: #{tpu_custom_call.1} parent=1 // pred_fallthru
      _
    // Predicated region
    $region6: #{tpu_custom_call.1} parent=1 // pred_check
      _
    $region7: #{tpu_custom_call.1} parent=1 // pred_check_branch
      %12 = sbr.rel (0) target = $region9
    $region8: #{tpu_custom_call.1} parent=1 // pred_region
      _
    $region9: #{tpu_custom_call.1} parent=1 // pred_fallthru
      _
    // Predicated region
    $region10: #{tpu_custom_call.1} parent=1 // pred_check
      _
    $region11: #{tpu_custom_call.1} parent=1 // pred_check_branch
      %14 = sbr.rel (0) target = $region13
    $region12: #{tpu_custom_call.1} parent=1 // pred_region
      _
    $region13: #{tpu_custom_call.1} parent=1 // pred_fallthru
      _
    %v15 = vld [vmem:[%s0] sm:$0xff]
    %v16 = vld [vmem:[%s0 + $0x8] sm:$0xff]
    %v17 = vld [vmem:[%s1] sm:$0xff]
    %19 = vset.pattern.permute.xlu0 0
    %20 = vperm.xlu0 %19, %v17
    %v21 = vpop.permute.xlu0 %20
    %v23 = vmul.f32 %v15, %v21
    %v24 = vmul.f32 %v16, %v21
    %v25 = vld [vmem:[%s2] sm:$0xff]
    %27 = vset.pattern.permute.xlu0 0
    %28 = vperm.xlu0 %27, %v25
    %v29 = vpop.permute.xlu0 %28
    %v31 = vadd.f32 %v23, %v29
    %v32 = vadd.f32 %v24, %v29
    %33 = vst [vmem:[#allocation2] sm:$0xff] %v31
    %34 = vst [vmem:[#allocation2 + $0x8] sm:$0xff] %v32
    // Predicated region
    $region14: #{tpu_custom_call.1} parent=1 // pred_check
      _
    $region15: #{tpu_custom_call.1} parent=1 // pred_check_branch
      %36 = sbr.rel (0) target = $region17
    $region16: #{tpu_custom_call.1} parent=1 // pred_region
      %s38 = ssub.s32 256, 256
      %39 = vsyncadd [#allocation3], %s38
      %s41 = sshll.u32 [#allocation2], 4
      %s42 = int_to_ptr.vmem [resolvable:$true] %s41
      %44 = dma.vmem_to_hbm [thread:$0]  %s42, 256, %s3, [#allocation3]
    $region17: #{tpu_custom_call.1} parent=1 // pred_fallthru
      _
    // Predicated region
    $region18: #{tpu_custom_call.1} parent=1 // pred_check
      _
    $region19: #{tpu_custom_call.1} parent=1 // pred_check_branch
      %46 = sbr.rel (0) target = $region21
    $region20: #{tpu_custom_call.1} parent=1 // pred_region
      %47 = dma.done [#allocation3], 256
    $region21: #{tpu_custom_call.1} parent=1 // pred_fallthru
      _
    %48 = vsyncpa [#allocation3], 1

</llo_original>
